<compile_context>
chip_gen: v7x
topology: tpu7x:2x2x1
jax: 0.10.0
libtpu: 0.0.40
codegen_flags: <defaults>
</compile_context>

<pallas_src>
import functools
import math

import numpy as np
import jax
import jax.numpy as jnp
from jax.experimental import pallas as pl
from jax.experimental.pallas import tpu as pltpu


# ----------------------------------------------------------------------------
# Parameter / buffer construction (glue, mirrors PyTorch __init__)
# ----------------------------------------------------------------------------
def _spiral_indices(height: int, width: int) -> np.ndarray:
    """Spiral-order indices for a height x width grid (matches the torch impl)."""
    grid = np.arange(height * width).reshape(height, width)
    spiral_idx = []
    while grid.size > 0:
        spiral_idx.extend(grid[0, :].tolist())
        grid = grid[1:, :]
        if grid.size == 0:
            break
        spiral_idx.extend(grid[:, -1].tolist())
        grid = grid[:, :-1]
        if grid.size == 0:
            break
        spiral_idx.extend(grid[-1, ::-1].tolist())
        grid = grid[:-1, :]
        if grid.size == 0:
            break
        spiral_idx.extend(grid[::-1, 0].tolist())
        grid = grid[:, 1:]
    spiral_idx.reverse()
    return np.asarray(spiral_idx, dtype=np.int32)


def build_spiral_pe(d_model: int, height: int, width: int) -> jnp.ndarray:
    """Returns the pe table of shape [height*width, d_model], float32.

    (Equals the torch buffer `pe` with its size-1 middle dim squeezed out.)
    """
    y_coords, x_coords = np.meshgrid(
        np.arange(height), np.arange(width), indexing="ij"
    )
    coords = np.stack([y_coords.flatten(), x_coords.flatten()], axis=1)  # [HW, 2]
    spiral_idx = _spiral_indices(height, width)
    spiral_coords = coords[spiral_idx]                                    # [HW, 2]
    y = spiral_coords[:, 0].astype(np.float32)[:, None]                   # [HW, 1]
    x = spiral_coords[:, 1].astype(np.float32)[:, None]                   # [HW, 1]
    div_term = np.exp(
        np.arange(0, d_model, 2, dtype=np.float32) * (-math.log(10000.0) / d_model)
    )                                                                     # [D/2]
    pe = np.zeros((height * width, d_model), dtype=np.float32)
    pe[:, 0::2] = np.sin(y * div_term) + np.sin(x * div_term)
    pe[:, 1::2] = np.cos(y * div_term) + np.cos(x * div_term)
    return jnp.asarray(pe)                                                # [HW, D]


# ----------------------------------------------------------------------------
# Pallas kernel: per-batch strided add, no tile-sized temporaries
# ----------------------------------------------------------------------------
def _add_pe_kernel(x_ref, pe_ref, o_ref, *, d_model: int, batches_per_tile: int):
    # x_ref : [TILE_S, batches_per_tile * D]  (lane-dense slab tile)
    # pe_ref: [TILE_S, D]                     (dense pe tile, reused per batch)
    pe = pe_ref[...]
    # Static unrolled batch loop: each iteration is a single load + add + store
    # on a [TILE_S, D] sub-slab.  No replicated pe, no full-size result temp.
    for b in range(batches_per_tile):
        sl = slice(b * d_model, (b + 1) * d_model)
        o_ref[:, sl] = (x_ref[:, sl] + pe).astype(o_ref.dtype)


def _round_down(a: int, m: int) -> int:
    return (a // m) * m


def _round_up(a: int, m: int) -> int:
    return ((a + m - 1) // m) * m


def spiral_positional_encoding_forward(
    x: jnp.ndarray,
    pe: jnp.ndarray,
    *,
    target_block_bytes: int = 4 * 1024 * 1024,
) -> jnp.ndarray:
    """x: [S, B, D]; pe: [height*width, D]. Returns x + pe[:S] (eval-mode dropout).

    Note: x's buffer is donated (input_output_aliases) — do not read x after
    this call inside a jit region.
    """
    S, B, D = x.shape
    HW, D_pe = pe.shape
    if D_pe != D:
        raise ValueError(f"pe d_model {D_pe} != x embed dim {D}")
    if S > HW:
        raise ValueError(f"sequence length {S} exceeds pe table size {HW}")

    N = B * D
    x2 = x.reshape(S, N)  # contiguous view: x2[s, b*D + d] == x[s, b, d]

    # Pre-cast pe once in the wrapper (halves pe HBM traffic for bf16 x and
    # enables a native-dtype add in the kernel).
    pe_in = pe if pe.dtype == x.dtype else pe.astype(x.dtype)

    itemsize = jnp.dtype(x.dtype).itemsize

    # ---- lane tiling (only needed when a single row slab is huge) -----------
    if D % 128 == 0:
        # Whole-batch lane chunks keep (8,128)-legal tiles and a trivial pe
        # broadcast (same pe tile reused across the lane grid axis).
        max_bpt = max(1, target_block_bytes // (8 * D * itemsize))
        bpt = min(B, max_bpt)
    else:
        # Lane tiling would produce a non-128-multiple last block dim; keep
        # the full row (block last dim == full array dim is always legal).
        bpt = B
    tile_n = bpt * D

    # ---- sublane (S) tiling --------------------------------------------------
    budget_rows = max(1, target_block_bytes // (tile_n * itemsize))
    tile_s = max(8, _round_down(budget_rows, 8))
    tile_s = min(tile_s, _round_up(S, 8))
    if S > 8:
        # Ensure >= 2 grid steps so both v7x TensorCores get work.
        tile_s = min(tile_s, max(8, _round_up(pl.cdiv(S, 2), 8)))

    grid = (pl.cdiv(S, tile_s), pl.cdiv(B, bpt))

    # Explicit VMEM limit: x + out tiles double-buffered, pe tile double-buffered.
    pe_itemsize = jnp.dtype(pe_in.dtype).itemsize
    tile_bytes = tile_s * tile_n * itemsize
    pe_tile_bytes = tile_s * D * pe_itemsize
    vmem_est = 4 * tile_bytes + 2 * pe_tile_bytes
    vmem_limit = int(min(48 * 1024 * 1024, max(2 * vmem_est, 16 * 1024 * 1024)))

    out2 = pl.pallas_call(
        functools.partial(_add_pe_kernel, d_model=D, batches_per_tile=bpt),
        out_shape=jax.ShapeDtypeStruct((S, N), x.dtype),
        grid_spec=pltpu.PrefetchScalarGridSpec(
            num_scalar_prefetch=0,
            grid=grid,
            in_specs=[
                pl.BlockSpec((tile_s, tile_n), lambda i, j: (i, j)),  # x slab tile
                pl.BlockSpec((tile_s, D), lambda i, j: (i, 0)),       # pe tile
            ],
            out_specs=pl.BlockSpec((tile_s, tile_n), lambda i, j: (i, j)),
        ),
        compiler_params=pltpu.CompilerParams(
            dimension_semantics=("parallel", "parallel"),
            vmem_limit_bytes=vmem_limit,
        ),
        input_output_aliases={0: 0},   # in-place add into x's (donated) buffer
    )(x2, pe_in)

    return out2.reshape(S, B, D)


# ----------------------------------------------------------------------------
# Demo / self-test
# ----------------------------------------------------------------------------
if __name__ == "__main__":
    d_model, height, width = 128, 4, 4   # pe covers height*width = 16 positions
    seq_len, batch = 16, 4               # x: [seq, batch, d_model]

    key = jax.random.PRNGKey(0)
    x = jax.random.normal(key, (seq_len, batch, d_model), dtype=jnp.float32)

    pe = build_spiral_pe(d_model, height, width)             # [16, 128]

    # Reference, computed before the kernel (the kernel donates x's slab).
    ref = jax.block_until_ready(x + pe[:seq_len][:, None, :])

    out = spiral_positional_encoding_forward(x, pe)          # grid = (2, 1)
    out = jax.block_until_ready(out)

    assert out.shape == (seq_len, batch, d_model)
    np.testing.assert_allclose(np.asarray(out), np.asarray(ref), rtol=1e-6, atol=1e-6)

    print("KERNEL_OK")
</pallas_src>

<mosaic_0001>
module attributes {stable_mosaic.version = 11 : i64} {
  func.func @_add_pe_kernel(%arg0: i32, %arg1: i32, %arg2: memref<8x512xf32, #tpu.memory_space<vmem>>, %arg3: memref<8x128xf32, #tpu.memory_space<vmem>>, %arg4: memref<8x512xf32, #tpu.memory_space<vmem>>) attributes {dimension_semantics = [#tpu.dimension_semantics<parallel>, #tpu.dimension_semantics<parallel>], iteration_bounds = array<i64: 2, 1>, scalar_prefetch = 0 : i64, scratch_operands = 0 : i64, tpu.core_type = #tpu.core_type<tc>, window_params = [{transform_indices = @transform_0, window_bounds = array<i64: 8, 512>}, {transform_indices = @transform_1, window_bounds = array<i64: 8, 128>}, {transform_indices = @transform_2, window_bounds = array<i64: 8, 512>}]} {
    %c0 = arith.constant 0 : index
    %c0_0 = arith.constant 0 : index
    %0 = vector.load %arg3[%c0, %c0_0] : memref<8x128xf32, #tpu.memory_space<vmem>>, vector<8x128xf32>
    %c0_1 = arith.constant 0 : index
    %c0_2 = arith.constant 0 : index
    %1 = vector.load %arg2[%c0_1, %c0_2] : memref<8x512xf32, #tpu.memory_space<vmem>>, vector<8x128xf32>
    %2 = arith.addf %1, %0 : vector<8x128xf32>
    %c0_3 = arith.constant 0 : index
    %c0_4 = arith.constant 0 : index
    %3 = vector.load %arg4[%c0_3, %c0_4] : memref<8x512xf32, #tpu.memory_space<vmem>>, vector<8x128xf32>
    tpu.vector_store %arg4[%c0_3, %c0_4], %2 {strides = array<i32>} : memref<8x512xf32, #tpu.memory_space<vmem>>, vector<8x128xf32>,
    %c0_5 = arith.constant 0 : index
    %c128 = arith.constant 128 : index
    %4 = vector.load %arg2[%c0_5, %c128] : memref<8x512xf32, #tpu.memory_space<vmem>>, vector<8x128xf32>
    %5 = arith.addf %4, %0 : vector<8x128xf32>
    %c0_6 = arith.constant 0 : index
    %c128_7 = arith.constant 128 : index
    %6 = vector.load %arg4[%c0_6, %c128_7] : memref<8x512xf32, #tpu.memory_space<vmem>>, vector<8x128xf32>
    tpu.vector_store %arg4[%c0_6, %c128_7], %5 {strides = array<i32>} : memref<8x512xf32, #tpu.memory_space<vmem>>, vector<8x128xf32>,
    %c0_8 = arith.constant 0 : index
    %c256 = arith.constant 256 : index
    %7 = vector.load %arg2[%c0_8, %c256] : memref<8x512xf32, #tpu.memory_space<vmem>>, vector<8x128xf32>
    %8 = arith.addf %7, %0 : vector<8x128xf32>
    %c0_9 = arith.constant 0 : index
    %c256_10 = arith.constant 256 : index
    %9 = vector.load %arg4[%c0_9, %c256_10] : memref<8x512xf32, #tpu.memory_space<vmem>>, vector<8x128xf32>
    tpu.vector_store %arg4[%c0_9, %c256_10], %8 {strides = array<i32>} : memref<8x512xf32, #tpu.memory_space<vmem>>, vector<8x128xf32>,
    %c0_11 = arith.constant 0 : index
    %c384 = arith.constant 384 : index
    %10 = vector.load %arg2[%c0_11, %c384] : memref<8x512xf32, #tpu.memory_space<vmem>>, vector<8x128xf32>
    %11 = arith.addf %10, %0 : vector<8x128xf32>
    %c0_12 = arith.constant 0 : index
    %c384_13 = arith.constant 384 : index
    %12 = vector.load %arg4[%c0_12, %c384_13] : memref<8x512xf32, #tpu.memory_space<vmem>>, vector<8x128xf32>
    tpu.vector_store %arg4[%c0_12, %c384_13], %11 {strides = array<i32>} : memref<8x512xf32, #tpu.memory_space<vmem>>, vector<8x128xf32>,
    return
  }
  func.func @transform_0(%arg0: i32, %arg1: i32) -> (i32, i32) {
    %c0_i32 = arith.constant 0 : i32
    return %arg0, %arg1 : i32, i32
  }
  func.func @transform_1(%arg0: i32, %arg1: i32) -> (i32, i32) {
    %c0_i32 = arith.constant 0 : i32
    %c0_i32_0 = arith.constant 0 : i32
    return %arg0, %c0_i32 : i32, i32
  }
  func.func @transform_2(%arg0: i32, %arg1: i32) -> (i32, i32) {
    %c0_i32 = arith.constant 0 : i32
    return %arg0, %arg1 : i32, i32
  }
}

</mosaic_0001>

<llo_original>
// kernel: tpu_custom_call.1
$region0: #{tpu_custom_call.1}
  #allocation0 [shape = 'u32[]', space=smem, size = 0x4, offset = 0x4, fixed_abs, tag = 'smem constant byte address 0x4 - core index']
  #allocation1 [shape = 'u32[144,128]{1,0:T(1,128)}', space=vmem, size = 0x12000, scoped, tag = 'internal scratch']
  %s0 = inlined_call_operand.hbm [shape: f32[16,512], index: 0, kind: input, shape index: {}, may-alias: {0,2}]
  %s1 = inlined_call_operand.vmem [shape: f32[16,128], index: 1, kind: input, shape index: {}]
  %s2 = inlined_call_operand.hbm [shape: f32[16,512], index: 2, kind: output, shape index: {}, may-alias: {0,2}]
  %s3 = sld [smem:[#allocation0]]
  $region45: #{tpu_custom_call.1} parent=0
    _
  %s5 = ssub.s32 1, %s3
  %s6 = scalar_select 0, %s5, %s3
  $region1: #{tpu_custom_call.1} parent=0
    #allocation2 [shape = 'u8[32768]{0}', space=vmem, size = 0x8000, scoped, tag = 'input window, operand 0']
    #allocation3 [shape = 's32[2]{0}', space=sflag, size = 0x8, scoped, tag = 'scoped memory for tpu_custom_call.1']
    #allocation4 [shape = 's32[2]{0}', space=sflag, size = 0x8, scoped, tag = 'scoped memory for tpu_custom_call.1']
    #allocation5 [shape = 'u8[32768]{0}', space=vmem, size = 0x8000, scoped, tag = 'output window, operand 0']
    %7 = vsyncpa [#allocation3], 0
    %s8 = scalar_lea.sflag [#allocation3], 1
    %9 = vsyncpa %s8, 0
    %10 = vsyncpa [#allocation4], 0
    %s11 = scalar_lea.sflag [#allocation4], 1
    %12 = vsyncpa %s11, 0
    loop: start=0, step=1, limit=4
    $region2: #{tpu_custom_call.1} parent=1 // loop_pre_header
      _
    $region3: #{tpu_custom_call.1} parent=1 // loop_header
      %s14 = sphi 0, %s18
      %p15 = scmp.ge.s32.totalorder %s14, 4
      %s21 = sphi 0, %s33
      %s22 = sphi 0, %s29
      %s23 = sphi 0, %s21
      %s24 = sphi 0, %s22
      %s25 = sphi 0, %s23
      %s26 = sphi 0, %s24
      %s38 = sphi 0, %s40
      %s41 = sphi 0, %s38
      %s42 = sphi 0, %s41
      %s58 = sphi 0, %s42
      %s64 = sphi 0, %s66
      %s67 = sphi 0, %s64
      %s68 = sphi 0, %s67
      %s84 = sphi 0, %s68
      %s92 = sphi 0, %s94
      %s95 = sphi 0, %s92
      %s96 = sphi 0, %s95
      %s112 = sphi 0, %s96
    $region4: #{tpu_custom_call.1} parent=1 // loop_header_branch
      %17 = sbr.rel (%p15) target = $region8
    $region5: #{tpu_custom_call.1} parent=1 // loop_body
      %s19 = ssub.s32 %s14, 1
      %s20 = ssub.s32 %s14, 2
      %s27 = sadd.s32 1, %s22
      %p28 = scmp.ge.s32.totalorder %s27, 1
      %s29 = scalar_select %p28, 0, %s27
      %s30 = sadd.s32 1, %s21
      %s31 = scalar_select %p28, %s30, %s21
      %p32 = scmp.ge.s32.totalorder %s31, 2
      %s33 = scalar_select %p32, 0, %s31
      %s34 = ssub.s32 %s21, %s33
      %s35 = ssub.s32 %s22, %s29
      %s36 = sor.u32 %s34, %s35
      %p37 = scmp.eq.s32.totalorder %s36, 0
      %s39 = sadd.s32 %s38, 1
      %s40 = scalar_select %p37, %s38, %s39
      %p43 = pneg %p37
      %p44 = scmp.eq.s32.totalorder %s14, 1
      %p45 = por %p43, %p44
      %p46 = scmp.ne.s32.totalorder %s38, %s41
      %p47 = scmp.eq.s32.totalorder %s14, 0
      %p48 = por %p46, %p47
      %p49 = scmp.ne.s32.totalorder %s38, %s41
      %p50 = scmp.eq.s32.totalorder %s19, 1
      %p51 = por %p49, %p50
      %p52 = scmp.ne.s32.totalorder %s41, %s42
      %p53 = scmp.eq.s32.totalorder %s19, 0
      %p54 = por %p52, %p53
      %p55 = scmp.ne.s32.totalorder %s41, %s42
      %p56 = scmp.eq.s32.totalorder %s20, 1
      %p57 = por %p55, %p56
      %p59 = scmp.ne.s32.totalorder %s42, %s58
      %p60 = scmp.eq.s32.totalorder %s20, 0
      %p61 = por %p59, %p60
      %s62 = ssub.s32 %s21, %s33
      %p63 = scmp.eq.s32.totalorder %s62, 0
      %s65 = sadd.s32 %s64, 1
      %s66 = scalar_select %p63, %s64, %s65
      %p69 = pneg %p63
      %p70 = scmp.eq.s32.totalorder %s14, 1
      %p71 = por %p69, %p70
      %p72 = scmp.ne.s32.totalorder %s64, %s67
      %p73 = scmp.eq.s32.totalorder %s14, 0
      %p74 = por %p72, %p73
      %p75 = scmp.ne.s32.totalorder %s64, %s67
      %p76 = scmp.eq.s32.totalorder %s19, 1
      %p77 = por %p75, %p76
      %p78 = scmp.ne.s32.totalorder %s67, %s68
      %p79 = scmp.eq.s32.totalorder %s19, 0
      %p80 = por %p78, %p79
      %p81 = scmp.ne.s32.totalorder %s67, %s68
      %p82 = scmp.eq.s32.totalorder %s20, 1
      %p83 = por %p81, %p82
      %p85 = scmp.ne.s32.totalorder %s68, %s84
      %p86 = scmp.eq.s32.totalorder %s20, 0
      %p87 = por %p85, %p86
      %s88 = ssub.s32 %s21, %s33
      %s89 = ssub.s32 %s22, %s29
      %s90 = sor.u32 %s88, %s89
      %p91 = scmp.eq.s32.totalorder %s90, 0
      %s93 = sadd.s32 %s92, 1
      %s94 = scalar_select %p91, %s92, %s93
      %p97 = pneg %p91
      %p98 = scmp.eq.s32.totalorder %s14, 1
      %p99 = por %p97, %p98
      %p100 = scmp.ne.s32.totalorder %s92, %s95
      %p101 = scmp.eq.s32.totalorder %s14, 0
      %p102 = por %p100, %p101
      %p103 = scmp.ne.s32.totalorder %s92, %s95
      %p104 = scmp.eq.s32.totalorder %s19, 1
      %p105 = por %p103, %p104
      %p106 = scmp.ne.s32.totalorder %s95, %s96
      %p107 = scmp.eq.s32.totalorder %s19, 0
      %p108 = por %p106, %p107
      %p109 = scmp.ne.s32.totalorder %s95, %s96
      %p110 = scmp.eq.s32.totalorder %s20, 1
      %p111 = por %p109, %p110
      %p113 = scmp.ne.s32.totalorder %s96, %s112
      %p114 = scmp.eq.s32.totalorder %s20, 0
      %p115 = por %p113, %p114
      %p116 = scmp.le.s32.totalorder 1, %s14
      %p117 = scmp.lt.s32.totalorder %s14, 3
      %p118 = pnand %p116, %p117
      %p119 = pneg %p118
      // Predicated region
      $region9: #{tpu_custom_call.1} parent=5 // pred_check
        _
      $region10: #{tpu_custom_call.1} parent=5 // pred_check_branch
        %121 = sbr.rel (%p118) target = $region12
      $region11: #{tpu_custom_call.1} parent=5 // pred_region
        %s122 = ssub.s32 %s14, 1
      $region12: #{tpu_custom_call.1} parent=5 // pred_fallthru
        _
      %p123 = scmp.lt.s32.totalorder %s14, 2
      // Predicated region
      $region13: #{tpu_custom_call.1} parent=5 // pred_check
        %p124 = pneg %p123
      $region14: #{tpu_custom_call.1} parent=5 // pred_check_branch
        %126 = sbr.rel (%p124) target = $region16
      $region15: #{tpu_custom_call.1} parent=5 // pred_region
        // Predicated region
        $region17: #{tpu_custom_call.1} parent=15 // pred_check
          %p127 = pneg %p48
        $region18: #{tpu_custom_call.1} parent=15 // pred_check_branch
          %129 = sbr.rel (%p127) target = $region20
        $region19: #{tpu_custom_call.1} parent=15 // pred_region
          %s130 = sand.u32 %s38, 1
          %s131 = scalar_lea.sflag [#allocation3], %s130
          %s132 = sand.u32 %s38, 1
          %s133 = smul.addr %s132, 32
          %s134 = scalar_lea.vmem [#allocation2], %s133
          %s135 = smul.u32 4, %s22
          %s137 = ssub.s32 512, 512
          %138 = vsyncadd %s131, %s137
          %s139 = smul.addr %s21, 4
          %s140 = sadd.s32 %s135, %s139
          %s141 = smul.addr %s140, 128
          %s142 = scalar_lea.hbm %s0, %s141
          %s144 = sshll.u32 %s134, 4
          %s145 = int_to_ptr.vmem [resolvable:$true] %s144
          %147 = dma.hbm_to_vmem [thread:$0]  %s142, 512, %s145, %s131
        $region20: #{tpu_custom_call.1} parent=15 // pred_fallthru
          _
        // Predicated region
        $region21: #{tpu_custom_call.1} parent=15 // pred_check
          %p148 = pneg %p74
        $region22: #{tpu_custom_call.1} parent=15 // pred_check_branch
          %150 = sbr.rel (%p148) target = $region24
        $region23: #{tpu_custom_call.1} parent=15 // pred_region
          %p151 = scmp.lt.s32.totalorder %s21, 1
          %s152 = scalar_select %p151, %s21, 1
          %s153 = smul.addr %s152, 8
          %s154 = scalar_lea.vmem %s1, %s153
        $region24: #{tpu_custom_call.1} parent=15 // pred_fallthru
          _
      $region16: #{tpu_custom_call.1} parent=5 // pred_fallthru
        _
      %p155 = scmp.le.s32.totalorder 1, %s14
      %p156 = scmp.lt.s32.totalorder %s14, 3
      %p157 = pnand %p155, %p156
      %p158 = pneg %p157
      // Predicated region
      $region25: #{tpu_custom_call.1} parent=5 // pred_check
        _
      $region26: #{tpu_custom_call.1} parent=5 // pred_check_branch
        %160 = sbr.rel (%p157) target = $region28
      $region27: #{tpu_custom_call.1} parent=5 // pred_region
        %s161 = ssub.s32 %s14, 1
        %s162 = sand.u32 %s41, 1
        %s163 = scalar_lea.sflag [#allocation3], %s162
        %s164 = sand.u32 %s41, 1
        %s165 = smul.addr %s164, 32
        %s166 = scalar_lea.vmem [#allocation2], %s165
        // Predicated region
        $region29: #{tpu_custom_call.1} parent=27 // pred_check
          %p167 = pneg %p54
        $region30: #{tpu_custom_call.1} parent=27 // pred_check_branch
          %169 = sbr.rel (%p167) target = $region32
        $region31: #{tpu_custom_call.1} parent=27 // pred_region
          %170 = dma.done %s163, 512
        $region32: #{tpu_custom_call.1} parent=27 // pred_fallthru
          _
        %s171 = sand.u32 %s41, 1
        %s172 = scalar_lea.sflag [#allocation3], %s171
        %s173 = sand.u32 %s41, 1
        %s174 = smul.addr %s173, 32
        %s175 = scalar_lea.vmem [#allocation2], %s174
        %p176 = pneg %p54
        %p177 = pneg %p51
        %p178 = scmp.lt.s32.totalorder %s23, 1
        %s179 = scalar_select %p178, %s23, 1
        %s180 = smul.addr %s179, 8
        %s181 = scalar_lea.vmem %s1, %s180
        %p182 = pneg %p80
        %p183 = pneg %p77
        %p184 = pneg %p108
        %p185 = pneg %p105
        %s186 = sand.u32 %s95, 1
        %s187 = scalar_lea.sflag [#allocation4], %s186
        %s188 = sand.u32 %s95, 1
        %s189 = smul.addr %s188, 32
        %s190 = scalar_lea.vmem [#allocation5], %s189
        %s191 = smul.u32 4, %s24
        %p192 = scmp.lt.s32.totalorder %s23, 1
        %s193 = scalar_select %p192, %s23, 1
        %s194 = smul.addr %s193, 8
        %s195 = scalar_lea.vmem %s1, %s194
        %s196 = smul.u32 4, %s24
        %v197 = vld [vmem:[%s195] sm:$0xff]
        %v198 = vld [vmem:[%s166] sm:$0xff]
        %v199 = vadd.f32 %v198, %v197
        %200 = vst [vmem:[%s190] sm:$0xff] %v199
        %v201 = vld [vmem:[%s166 + $0x8] sm:$0xff]
        %v202 = vadd.f32 %v201, %v197
        %203 = vst [vmem:[%s190 + $0x8] sm:$0xff] %v202
        %v204 = vld [vmem:[%s166 + $0x10] sm:$0xff]
        %v205 = vadd.f32 %v204, %v197
        %206 = vst [vmem:[%s190 + $0x10] sm:$0xff] %v205
        %v207 = vld [vmem:[%s166 + $0x18] sm:$0xff]
        %v208 = vadd.f32 %v207, %v197
        %209 = vst [vmem:[%s190 + $0x18] sm:$0xff] %v208
        %s210 = sand.u32 %s95, 1
        %s211 = scalar_lea.sflag [#allocation4], %s210
        %s212 = sand.u32 %s95, 1
        %s213 = smul.addr %s212, 32
        %s214 = scalar_lea.vmem [#allocation5], %s213
        // Predicated region
        $region33: #{tpu_custom_call.1} parent=27 // pred_check
          %p215 = pneg %p105
        $region34: #{tpu_custom_call.1} parent=27 // pred_check_branch
          %217 = sbr.rel (%p215) target = $region36
        $region35: #{tpu_custom_call.1} parent=27 // pred_region
          %s218 = smul.u32 4, %s24
          %s220 = ssub.s32 512, 512
          %221 = vsyncadd %s211, %s220
          %s222 = smul.addr %s23, 4
          %s223 = sadd.s32 %s218, %s222
          %s224 = smul.addr %s223, 128
          %s225 = scalar_lea.hbm %s2, %s224
          %s227 = sshll.u32 %s214, 4
          %s228 = int_to_ptr.vmem [resolvable:$true] %s227
          %230 = dma.vmem_to_hbm [thread:$0]  %s228, 512, %s225, %s211
        $region36: #{tpu_custom_call.1} parent=27 // pred_fallthru
          _
      $region28: #{tpu_custom_call.1} parent=5 // pred_fallthru
        _
      %p231 = scmp.le.s32.totalorder 2, %s14
      // Predicated region
      $region37: #{tpu_custom_call.1} parent=5 // pred_check
        %p232 = pneg %p231
      $region38: #{tpu_custom_call.1} parent=5 // pred_check_branch
        %234 = sbr.rel (%p232) target = $region40
      $region39: #{tpu_custom_call.1} parent=5 // pred_region
        %s235 = ssub.s32 %s14, 2
        // Predicated region
        $region41: #{tpu_custom_call.1} parent=39 // pred_check
          %p236 = pneg %p111
        $region42: #{tpu_custom_call.1} parent=39 // pred_check_branch
          %238 = sbr.rel (%p236) target = $region44
        $region43: #{tpu_custom_call.1} parent=39 // pred_region
          %s239 = sand.u32 %s96, 1
          %s240 = scalar_lea.sflag [#allocation4], %s239
          %s241 = sand.u32 %s96, 1
          %s242 = smul.addr %s241, 32
          %s243 = scalar_lea.vmem [#allocation5], %s242
          %244 = dma.done %s240, 512
        $region44: #{tpu_custom_call.1} parent=39 // pred_fallthru
          _
      $region40: #{tpu_custom_call.1} parent=5 // pred_fallthru
        _
    $region6: #{tpu_custom_call.1} parent=1 // loop_footer
      %s18 = sadd.s32 1, %s14
    $region7: #{tpu_custom_call.1} parent=1 // loop_footer_branch
      %13 = sbr.rel target = $region3
    $region8: #{tpu_custom_call.1} parent=1 // loop_exit
      _
    %245 = vsyncpa [#allocation3], 1
    %s246 = scalar_lea.sflag [#allocation3], 1
    %247 = vsyncpa %s246, 1
    %248 = vsyncpa [#allocation4], 1
    %s249 = scalar_lea.sflag [#allocation4], 1
    %250 = vsyncpa %s249, 1

</llo_original>
